<compile_context>
chip_gen: v7x
topology: tpu7x:2x2x1
jax: 0.10.0
libtpu: 0.0.40
codegen_flags: <defaults>
</compile_context>

<pallas_src>
import functools

import jax
import jax.numpy as jnp
from jax.experimental import pallas as pl
from jax.experimental.pallas import tpu as pltpu


# ---------------------------------------------------------------------------
# Pass 1: fused k/v projection.  x is read channel-major (C, tn); one stacked
# NN matmul produces [k; v] channel-major; the k slice is transposed (aligned
# f32 (128, tn) -> (tn, 128)) so pass 2 can use a plain NN score matmul.
# ---------------------------------------------------------------------------
def _kv_proj_kernel(x_ref, w_ref, b_ref, k_ref, v_ref, *, cq_pad, compute_dtype):
    x = x_ref[...].astype(compute_dtype)                           # (C, tn)
    kv = jnp.dot(w_ref[...], x, preferred_element_type=jnp.float32)  # (Ckv, tn)
    kv = kv + b_ref[...]                                           # (Ckv, 1) bias
    k_cm = kv[:cq_pad, :]                                          # (Cq_pad, tn)
    v_cm = kv[cq_pad:, :]                                          # (C, tn)
    k_ref[...] = jnp.transpose(k_cm, (1, 0)).astype(k_ref.dtype)   # (tn, Cq_pad)
    v_ref[...] = v_cm.astype(v_ref.dtype)                          # (C, tn)


# ---------------------------------------------------------------------------
# Pass 2: flash-style tiled attention + fused q projection + residual add.
# Keys live on sublanes, queries on lanes, so:
#   scores  s (tk, tq) = k_rm (tk, Cq_pad) @ q_cm (Cq_pad, tq)      [NN]
#   acc_cm  (C, tq)   += v_cm (C, tk)      @ p    (tk, tq)          [NN]
# softmax stats are (1, tq) sublane reductions and the output is stored
# channel-major directly -- no transposes in the hot loop or finalize.
# ---------------------------------------------------------------------------
def _flash_attn_kernel(wq_ref, bq_ref, k_ref, v_ref, x_ref, o_ref,
                       q_ref, m_ref, l_ref, acc_ref, *, compute_dtype):
    ki = pl.program_id(2)

    @pl.when(ki == 0)
    def _init():
        # q projection from the resident residual tile (once per q tile).
        x_cm = x_ref[...].astype(compute_dtype)                    # (C, tq)
        q = jnp.dot(wq_ref[...], x_cm,
                    preferred_element_type=jnp.float32)            # (Cq_pad, tq)
        q_ref[...] = (q + bq_ref[...]).astype(q_ref.dtype)
        m_ref[...] = jnp.full(m_ref.shape, -jnp.inf, jnp.float32)
        l_ref[...] = jnp.zeros(l_ref.shape, jnp.float32)
        acc_ref[...] = jnp.zeros(acc_ref.shape, jnp.float32)

    # s[j, i] = k_j . q_i -- plain NN matmul on the MXU.
    s = jnp.dot(k_ref[...], q_ref[...],
                preferred_element_type=jnp.float32)                # (tk, tq) f32

    m_prev = m_ref[...]                                            # (1, tq)
    m_new = jnp.maximum(m_prev, jnp.max(s, axis=0, keepdims=True))
    alpha = jnp.exp(m_prev - m_new)                                # (1, tq)
    # TODO(synk): on v6e/v7x the exp argument could be cast to bf16 (EUP bf16
    # path); kept f32 here so the same kernel is optimal on v5e as well.
    p = jnp.exp(s - m_new)                                         # (tk, tq) f32

    l_ref[...] = alpha * l_ref[...] + jnp.sum(p, axis=0, keepdims=True)
    acc_ref[...] = alpha * acc_ref[...] + jnp.dot(
        v_ref[...], p.astype(compute_dtype),
        preferred_element_type=jnp.float32)                        # (C, tq) f32
    m_ref[...] = m_new

    @pl.when(ki == pl.num_programs(2) - 1)
    def _finalize():
        l = l_ref[...]
        inv = pl.reciprocal(l, approx=True)          # EUP slot
        inv = inv * (2.0 - l * inv)                  # one NR step -> f32 accurate
        o_ref[...] = (acc_ref[...] * inv
                      + x_ref[...].astype(jnp.float32)).astype(o_ref.dtype)


def _pick_tile(n, preferred):
    """Largest tile <= preferred that divides n (candidates are 128-multiples)."""
    for t in (preferred, 1024, 512, 256, 128):
        if t <= preferred and t <= n and n % t == 0:
            return t
    # TODO(synk): pad N to a tile multiple with key masking for N not divisible
    # by 128 (falling back to a full-N tile can blow VMEM for very large N).
    return n


def self_attention_block(x_nchw, params, *, tq=None, tk=None, tn=None,
                         compute_dtype=jnp.bfloat16):
    """x_nchw: (B, C, H, W). params: 1x1-conv weights/biases (see make_params)."""
    B, C, H, W = x_nchw.shape
    N = H * W
    Cq = params["wq"].shape[0]
    Cq_pad = ((Cq + 127) // 128) * 128          # pad q/k channels to 128 lanes
    Ckv = Cq_pad + C

    tn = _pick_tile(N, 512 if tn is None else tn)   # pass-1 streaming row tile
    tq = _pick_tile(N, 256 if tq is None else tq)   # flash query tile
    tk = _pick_tile(N, 512 if tk is None else tk)   # flash key/value tile

    # (B, C, N) view -- a free reshape, no transposes anywhere in the wrapper.
    x_cn = x_nchw.reshape(B, C, N)

    # Zero-padded q weights (exact: padded channels contribute 0 to q.k).
    wq_p = jnp.zeros((Cq_pad, C), jnp.float32).at[:Cq].set(
        params["wq"]).astype(compute_dtype)
    bq_p = jnp.zeros((Cq_pad, 1), jnp.float32).at[:Cq, 0].set(params["bq"])

    # Stacked [k; v] projection weights (channel-major, as in the conv).
    wk_p = jnp.zeros((Cq_pad, C), jnp.float32).at[:Cq].set(params["wk"])
    bk_p = jnp.zeros((Cq_pad,), jnp.float32).at[:Cq].set(params["bk"])
    w_kv = jnp.concatenate([wk_p, params["wv"]], axis=0).astype(compute_dtype)
    b_kv = jnp.concatenate([bk_p, params["bv"]]).reshape(Ckv, 1).astype(jnp.float32)

    vmem_limit = 32 * 1024 * 1024  # fits v5e/v6e/v7x scoped budgets

    # ------------------------- Pass 1: k/v projections ----------------------
    k_rm, v_cm = pl.pallas_call(
        functools.partial(_kv_proj_kernel, cq_pad=Cq_pad,
                          compute_dtype=compute_dtype),
        out_shape=(jax.ShapeDtypeStruct((B, N, Cq_pad), compute_dtype),
                   jax.ShapeDtypeStruct((B, C, N), compute_dtype)),
        grid_spec=pltpu.PrefetchScalarGridSpec(
            num_scalar_prefetch=0,
            grid=(B, N // tn),
            in_specs=[
                pl.BlockSpec((pl.Squeezed(), C, tn), lambda b, n: (b, 0, n)),
                pl.BlockSpec((Ckv, C), lambda b, n: (0, 0)),
                pl.BlockSpec((Ckv, 1), lambda b, n: (0, 0)),
            ],
            out_specs=[
                pl.BlockSpec((pl.Squeezed(), tn, Cq_pad), lambda b, n: (b, n, 0)),
                pl.BlockSpec((pl.Squeezed(), C, tn), lambda b, n: (b, 0, n)),
            ],
        ),
        compiler_params=pltpu.CompilerParams(
            dimension_semantics=("parallel", "parallel"),
            vmem_limit_bytes=vmem_limit),
    )(x_cn, w_kv, b_kv)

    # ------------- Pass 2: fused q proj + flash attention + residual --------
    out_cn = pl.pallas_call(
        functools.partial(_flash_attn_kernel, compute_dtype=compute_dtype),
        out_shape=jax.ShapeDtypeStruct((B, C, N), x_nchw.dtype),
        grid_spec=pltpu.PrefetchScalarGridSpec(
            num_scalar_prefetch=0,
            grid=(B, N // tq, N // tk),
            in_specs=[
                pl.BlockSpec((Cq_pad, C), lambda b, qi, ki: (0, 0)),
                pl.BlockSpec((Cq_pad, 1), lambda b, qi, ki: (0, 0)),
                pl.BlockSpec((pl.Squeezed(), tk, Cq_pad), lambda b, qi, ki: (b, ki, 0)),
                pl.BlockSpec((pl.Squeezed(), C, tk), lambda b, qi, ki: (b, 0, ki)),
                pl.BlockSpec((pl.Squeezed(), C, tq), lambda b, qi, ki: (b, 0, qi)),
            ],
            out_specs=pl.BlockSpec((pl.Squeezed(), C, tq),
                                   lambda b, qi, ki: (b, 0, qi)),
            scratch_shapes=[
                pltpu.VMEM((Cq_pad, tq), compute_dtype),  # q tile (channel-major)
                pltpu.VMEM((1, tq), jnp.float32),         # running max m
                pltpu.VMEM((1, tq), jnp.float32),         # running sum l
                pltpu.VMEM((C, tq), jnp.float32),         # unnormalized output acc
            ],
        ),
        compiler_params=pltpu.CompilerParams(
            dimension_semantics=("parallel", "parallel", "arbitrary"),
            vmem_limit_bytes=vmem_limit),
    )(wq_p, bq_p, k_rm, v_cm, x_cn)

    return out_cn.reshape(B, C, H, W)


# ---------------------------------------------------------------------------
# Pure-JAX reference mirroring the PyTorch forward (no gamma in the spec).
# ---------------------------------------------------------------------------
def _reference(x_nchw, params):
    B, C, H, W = x_nchw.shape
    N = H * W
    x = x_nchw.reshape(B, C, N)
    q = jnp.einsum("qc,bcn->bqn", params["wq"], x) + params["bq"][None, :, None]
    k = jnp.einsum("qc,bcn->bqn", params["wk"], x) + params["bk"][None, :, None]
    v = jnp.einsum("oc,bcn->bon", params["wv"], x) + params["bv"][None, :, None]
    att = jnp.einsum("bqi,bqj->bij", q, k)          # (B, N, N)
    att = jax.nn.softmax(att, axis=-1)
    out = jnp.einsum("bcj,bij->bci", v, att)        # value @ att^T
    return out.reshape(B, C, H, W) + x_nchw


def make_params(key, in_dim):
    """Deterministic synthetic parameters (shapes match nn.Conv2d 1x1 convs)."""
    cq = in_dim // 8
    k1, k2, k3, k4, k5, k6 = jax.random.split(key, 6)
    scale = 1.0 / jnp.sqrt(in_dim)
    return {
        "wq": jax.random.normal(k1, (cq, in_dim), jnp.float32) * scale,
        "bq": jax.random.normal(k2, (cq,), jnp.float32) * 0.01,
        "wk": jax.random.normal(k3, (cq, in_dim), jnp.float32) * scale,
        "bk": jax.random.normal(k4, (cq,), jnp.float32) * 0.01,
        "wv": jax.random.normal(k5, (in_dim, in_dim), jnp.float32) * scale,
        "bv": jax.random.normal(k6, (in_dim,), jnp.float32) * 0.01,
    }


if __name__ == "__main__":
    key = jax.random.PRNGKey(0)

    def make_case(B, C, H, W, salt):
        kx, kp = jax.random.split(jax.random.fold_in(key, salt))
        x = jax.random.normal(kx, (B, C, H, W), jnp.float32)
        params = make_params(kp, C)
        return x, params, _reference(x, params)

    # Case A: small map; force 128x128 tiles so the multi-kv-step online
    # softmax path is exercised.  f32 -> tight check, bf16 default -> loose.
    x, params, ref = make_case(2, 16, 16, 16, 0)
    out_f32 = jax.block_until_ready(
        self_attention_block(x, params, tq=128, tk=128, tn=128,
                             compute_dtype=jnp.float32))
    assert out_f32.shape == x.shape
    assert jnp.allclose(out_f32, ref, atol=1e-4, rtol=1e-4), "case A f32 mismatch"

    out_bf16 = jax.block_until_ready(self_attention_block(x, params))
    assert float(jnp.max(jnp.abs(out_bf16 - ref))) < 0.25, "case A bf16 mismatch"

    # Case B: N=1024 exercises the default tn=512 / tq=256 / tk=512 tiles and
    # multi-step accumulation with the default tile picker.
    x2, params2, ref2 = make_case(1, 32, 32, 32, 1)
    out2_f32 = jax.block_until_ready(
        self_attention_block(x2, params2, compute_dtype=jnp.float32))
    assert jnp.allclose(out2_f32, ref2, atol=2e-4, rtol=2e-4), "case B f32 mismatch"

    out2_bf16 = jax.block_until_ready(self_attention_block(x2, params2))
    assert float(jnp.max(jnp.abs(out2_bf16 - ref2))) < 0.25, "case B bf16 mismatch"

    print("KERNEL_OK")
</pallas_src>

<mosaic_0001>
module attributes {stable_mosaic.version = 11 : i64} {
  func.func @_kv_proj_kernel(%arg0: i32, %arg1: i32, %arg2: memref<1x16x128xf32, #tpu.memory_space<vmem>>, %arg3: memref<144x16xf32, #tpu.memory_space<vmem>>, %arg4: memref<144x1xf32, #tpu.memory_space<vmem>>, %arg5: memref<1x128x128xf32, #tpu.memory_space<vmem>>, %arg6: memref<1x16x128xf32, #tpu.memory_space<vmem>>) attributes {dimension_semantics = [#tpu.dimension_semantics<parallel>, #tpu.dimension_semantics<parallel>], iteration_bounds = array<i64: 2, 2>, scalar_prefetch = 0 : i64, scratch_operands = 0 : i64, tpu.core_type = #tpu.core_type<tc>, window_params = [{transform_indices = @transform_0, window_bounds = array<i64: 1, 16, 128>}, {pipeline_mode = #tpu.pipeline_mode<synchronous>, transform_indices = @transform_1, window_bounds = array<i64: 144, 16>}, {pipeline_mode = #tpu.pipeline_mode<synchronous>, transform_indices = @transform_2, window_bounds = array<i64: 144, 1>}, {transform_indices = @transform_3, window_bounds = array<i64: 1, 128, 128>}, {transform_indices = @transform_4, window_bounds = array<i64: 1, 16, 128>}]} {
    %c0 = arith.constant 0 : index
    %c0_0 = arith.constant 0 : index
    %c0_1 = arith.constant 0 : index
    %0 = vector.load %arg2[%c0, %c0_0, %c0_1] : memref<1x16x128xf32, #tpu.memory_space<vmem>>, vector<1x16x128xf32>
    %1 = vector.shape_cast %0 : vector<1x16x128xf32> to vector<16x128xf32>
    %c0_2 = arith.constant 0 : index
    %c0_3 = arith.constant 0 : index
    %2 = vector.load %arg3[%c0_2, %c0_3] : memref<144x16xf32, #tpu.memory_space<vmem>>, vector<144x16xf32>
    %cst = arith.constant dense<0.000000e+00> : vector<144x128xf32>
    %3 = tpu.matmul %2, %1, %cst {dimension_numbers = #tpu.dot_dimension_numbers<[1], [0], [0], [1], [0, 0, 1, 1], [], []>} : vector<144x16xf32>, vector<16x128xf32>, vector<144x128xf32> -> vector<144x128xf32>
    %c0_4 = arith.constant 0 : index
    %c0_5 = arith.constant 0 : index
    %4 = vector.load %arg4[%c0_4, %c0_5] : memref<144x1xf32, #tpu.memory_space<vmem>>, vector<144x1xf32>
    %5 = vector.broadcast %4 : vector<144x1xf32> to vector<144x128xf32>
    %6 = arith.addf %3, %5 : vector<144x128xf32>
    %7 = vector.extract_strided_slice %6 {offsets = [0, 0], sizes = [128, 128], strides = [1, 1]} : vector<144x128xf32> to vector<128x128xf32>
    %8 = vector.extract_strided_slice %6 {offsets = [128, 0], sizes = [16, 128], strides = [1, 1]} : vector<144x128xf32> to vector<16x128xf32>
    %9 = tpu.transpose %7, [1, 0] : vector<128x128xf32> -> vector<128x128xf32>
    %c0_6 = arith.constant 0 : index
    %c0_7 = arith.constant 0 : index
    %c0_8 = arith.constant 0 : index
    %10 = vector.load %arg5[%c0_6, %c0_7, %c0_8] : memref<1x128x128xf32, #tpu.memory_space<vmem>>, vector<1x128x128xf32>
    %11 = vector.shape_cast %10 : vector<1x128x128xf32> to vector<128x128xf32>
    %12 = vector.shape_cast %9 : vector<128x128xf32> to vector<1x128x128xf32>
    tpu.vector_store %arg5[%c0_6, %c0_7, %c0_8], %12 {strides = array<i32>} : memref<1x128x128xf32, #tpu.memory_space<vmem>>, vector<1x128x128xf32>,
    %c0_9 = arith.constant 0 : index
    %c0_10 = arith.constant 0 : index
    %c0_11 = arith.constant 0 : index
    %13 = vector.load %arg6[%c0_9, %c0_10, %c0_11] : memref<1x16x128xf32, #tpu.memory_space<vmem>>, vector<1x16x128xf32>
    %14 = vector.shape_cast %13 : vector<1x16x128xf32> to vector<16x128xf32>
    %15 = vector.shape_cast %8 : vector<16x128xf32> to vector<1x16x128xf32>
    tpu.vector_store %arg6[%c0_9, %c0_10, %c0_11], %15 {strides = array<i32>} : memref<1x16x128xf32, #tpu.memory_space<vmem>>, vector<1x16x128xf32>,
    return
  }
  func.func @transform_0(%arg0: i32, %arg1: i32) -> (i32, i32, i32) {
    %c0_i32 = arith.constant 0 : i32
    %c0_i32_0 = arith.constant 0 : i32
    return %arg0, %c0_i32, %arg1 : i32, i32, i32
  }
  func.func @transform_1(%arg0: i32, %arg1: i32) -> (i32, i32) {
    %c0_i32 = arith.constant 0 : i32
    %c0_i32_0 = arith.constant 0 : i32
    %c0_i32_1 = arith.constant 0 : i32
    return %c0_i32, %c0_i32_0 : i32, i32
  }
  func.func @transform_2(%arg0: i32, %arg1: i32) -> (i32, i32) {
    %c0_i32 = arith.constant 0 : i32
    %c0_i32_0 = arith.constant 0 : i32
    %c0_i32_1 = arith.constant 0 : i32
    return %c0_i32, %c0_i32_0 : i32, i32
  }
  func.func @transform_3(%arg0: i32, %arg1: i32) -> (i32, i32, i32) {
    %c0_i32 = arith.constant 0 : i32
    %c0_i32_0 = arith.constant 0 : i32
    return %arg0, %arg1, %c0_i32 : i32, i32, i32
  }
  func.func @transform_4(%arg0: i32, %arg1: i32) -> (i32, i32, i32) {
    %c0_i32 = arith.constant 0 : i32
    %c0_i32_0 = arith.constant 0 : i32
    return %arg0, %c0_i32, %arg1 : i32, i32, i32
  }
}

</mosaic_0001>

<llo_original>
// kernel: tpu_custom_call.1
$region0: #{tpu_custom_call.1}
  #allocation0 [shape = 'u32[]', space=smem, size = 0x4, offset = 0x4, fixed_abs, tag = 'smem constant byte address 0x4 - core index']
  #allocation1 [shape = 'u32[144,128]{1,0:T(1,128)}', space=vmem, size = 0x12000, scoped, tag = 'internal scratch']
  %s0 = inlined_call_operand.vmem [shape: f32[2,16,256], index: 0, kind: input, shape index: {}]
  %s1 = inlined_call_operand.vmem [shape: f32[144,16], index: 1, kind: input, shape index: {}]
  %s2 = inlined_call_operand.vmem [shape: f32[144,1], index: 2, kind: input, shape index: {}]
  %s3 = inlined_call_operand.hbm [shape: f32[2,256,128], index: 3, kind: output, shape index: {0}]
  %s4 = inlined_call_operand.hbm [shape: f32[2,16,256], index: 4, kind: output, shape index: {1}]
  %5 = xla_tuple %s3, %s4
  %s6 = sld [smem:[#allocation0]]
  $region91: #{tpu_custom_call.1} parent=0
    _
  %s8 = ssub.s32 1, %s6
  %s9 = scalar_select 0, %s8, %s6
  $region1: #{tpu_custom_call.1} parent=0
    #allocation2 [shape = 'u8[16384]{0}', space=vmem, size = 0x4000, scoped, tag = 'input window, operand 0']
    #allocation3 [shape = 'u8[131072]{0}', space=vmem, size = 0x20000, scoped, tag = 'output window, operand 0']
    #allocation4 [shape = 's32[2]{0}', space=sflag, size = 0x8, scoped, tag = 'scoped memory for tpu_custom_call.1']
    #allocation5 [shape = 'u8[16384]{0}', space=vmem, size = 0x4000, scoped, tag = 'output window, operand 1']
    #allocation6 [shape = 's32[2]{0}', space=sflag, size = 0x8, scoped, tag = 'scoped memory for tpu_custom_call.1']
    %10 = vsyncpa [#allocation4], 0
    %s11 = scalar_lea.sflag [#allocation4], 1
    %12 = vsyncpa %s11, 0
    %13 = vsyncpa [#allocation6], 0
    %s14 = scalar_lea.sflag [#allocation6], 1
    %15 = vsyncpa %s14, 0
    loop: start=0, step=1, limit=6
    $region2: #{tpu_custom_call.1} parent=1 // loop_pre_header
      _
    $region3: #{tpu_custom_call.1} parent=1 // loop_header
      %s17 = sphi 0, %s21
      %p18 = scmp.ge.s32.totalorder %s17, 6
      %s24 = sphi 0, %s36
      %s25 = sphi 0, %s32
      %s26 = sphi 0, %s24
      %s27 = sphi 0, %s25
      %s28 = sphi 0, %s26
      %s29 = sphi 0, %s27
      %s41 = sphi 0, %s43
      %s44 = sphi 0, %s41
      %s45 = sphi 0, %s44
      %s61 = sphi 0, %s45
      %s65 = sphi 0, %s65
      %s67 = sphi 0, %s65
      %s68 = sphi 0, %s67
      %s82 = sphi 0, %s68
      %s86 = sphi 0, %s86
      %s88 = sphi 0, %s86
      %s89 = sphi 0, %s88
      %s103 = sphi 0, %s89
      %s111 = sphi 0, %s113
      %s114 = sphi 0, %s111
      %s115 = sphi 0, %s114
      %s131 = sphi 0, %s115
      %s139 = sphi 0, %s141
      %s142 = sphi 0, %s139
      %s143 = sphi 0, %s142
      %s159 = sphi 0, %s143
    $region4: #{tpu_custom_call.1} parent=1 // loop_header_branch
      %20 = sbr.rel (%p18) target = $region8
    $region5: #{tpu_custom_call.1} parent=1 // loop_body
      %s22 = ssub.s32 %s17, 1
      %s23 = ssub.s32 %s17, 2
      %s30 = sadd.s32 1, %s25
      %p31 = scmp.ge.s32.totalorder %s30, 2
      %s32 = scalar_select %p31, 0, %s30
      %s33 = sadd.s32 1, %s24
      %s34 = scalar_select %p31, %s33, %s24
      %p35 = scmp.ge.s32.totalorder %s34, 2
      %s36 = scalar_select %p35, 0, %s34
      %s37 = ssub.s32 %s24, %s36
      %s38 = ssub.s32 %s25, %s32
      %s39 = sor.u32 %s37, %s38
      %p40 = scmp.eq.s32.totalorder %s39, 0
      %s42 = sadd.s32 %s41, 1
      %s43 = scalar_select %p40, %s41, %s42
      %p46 = pneg %p40
      %p47 = scmp.eq.s32.totalorder %s17, 3
      %p48 = por %p46, %p47
      %p49 = scmp.ne.s32.totalorder %s41, %s44
      %p50 = scmp.eq.s32.totalorder %s17, 0
      %p51 = por %p49, %p50
      %p52 = scmp.ne.s32.totalorder %s41, %s44
      %p53 = scmp.eq.s32.totalorder %s22, 3
      %p54 = por %p52, %p53
      %p55 = scmp.ne.s32.totalorder %s44, %s45
      %p56 = scmp.eq.s32.totalorder %s22, 0
      %p57 = por %p55, %p56
      %p58 = scmp.ne.s32.totalorder %s44, %s45
      %p59 = scmp.eq.s32.totalorder %s23, 3
      %p60 = por %p58, %p59
      %p62 = scmp.ne.s32.totalorder %s45, %s61
      %p63 = scmp.eq.s32.totalorder %s23, 0
      %p64 = por %p62, %p63
      %s66 = sadd.s32 %s65, 1
      %p69 = scmp.eq.s32.totalorder %s17, 3
      %p70 = scmp.ne.s32.totalorder %s65, %s67
      %p71 = scmp.eq.s32.totalorder %s17, 0
      %p72 = por %p70, %p71
      %p73 = scmp.ne.s32.totalorder %s65, %s67
      %p74 = scmp.eq.s32.totalorder %s22, 3
      %p75 = por %p73, %p74
      %p76 = scmp.ne.s32.totalorder %s67, %s68
      %p77 = scmp.eq.s32.totalorder %s22, 0
      %p78 = por %p76, %p77
      %p79 = scmp.ne.s32.totalorder %s67, %s68
      %p80 = scmp.eq.s32.totalorder %s23, 3
      %p81 = por %p79, %p80
      %p83 = scmp.ne.s32.totalorder %s68, %s82
      %p84 = scmp.eq.s32.totalorder %s23, 0
      %p85 = por %p83, %p84
      %s87 = sadd.s32 %s86, 1
      %p90 = scmp.eq.s32.totalorder %s17, 3
      %p91 = scmp.ne.s32.totalorder %s86, %s88
      %p92 = scmp.eq.s32.totalorder %s17, 0
      %p93 = por %p91, %p92
      %p94 = scmp.ne.s32.totalorder %s86, %s88
      %p95 = scmp.eq.s32.totalorder %s22, 3
      %p96 = por %p94, %p95
      %p97 = scmp.ne.s32.totalorder %s88, %s89
      %p98 = scmp.eq.s32.totalorder %s22, 0
      %p99 = por %p97, %p98
      %p100 = scmp.ne.s32.totalorder %s88, %s89
      %p101 = scmp.eq.s32.totalorder %s23, 3
      %p102 = por %p100, %p101
      %p104 = scmp.ne.s32.totalorder %s89, %s103
      %p105 = scmp.eq.s32.totalorder %s23, 0
      %p106 = por %p104, %p105
      %s107 = ssub.s32 %s24, %s36
      %s108 = ssub.s32 %s25, %s32
      %s109 = sor.u32 %s107, %s108
      %p110 = scmp.eq.s32.totalorder %s109, 0
      %s112 = sadd.s32 %s111, 1
      %s113 = scalar_select %p110, %s111, %s112
      %p116 = pneg %p110
      %p117 = scmp.eq.s32.totalorder %s17, 3
      %p118 = por %p116, %p117
      %p119 = scmp.ne.s32.totalorder %s111, %s114
      %p120 = scmp.eq.s32.totalorder %s17, 0
      %p121 = por %p119, %p120
      %p122 = scmp.ne.s32.totalorder %s111, %s114
      %p123 = scmp.eq.s32.totalorder %s22, 3
      %p124 = por %p122, %p123
      %p125 = scmp.ne.s32.totalorder %s114, %s115
      %p126 = scmp.eq.s32.totalorder %s22, 0
      %p127 = por %p125, %p126
      %p128 = scmp.ne.s32.totalorder %s114, %s115
      %p129 = scmp.eq.s32.totalorder %s23, 3
      %p130 = por %p128, %p129
      %p132 = scmp.ne.s32.totalorder %s115, %s131
      %p133 = scmp.eq.s32.totalorder %s23, 0
      %p134 = por %p132, %p133
      %s135 = ssub.s32 %s24, %s36
      %s136 = ssub.s32 %s25, %s32
      %s137 = sor.u32 %s135, %s136
      %p138 = scmp.eq.s32.totalorder %s137, 0
      %s140 = sadd.s32 %s139, 1
      %s141 = scalar_select %p138, %s139, %s140
      %p144 = pneg %p138
      %p145 = scmp.eq.s32.totalorder %s17, 3
      %p146 = por %p144, %p145
      %p147 = scmp.ne.s32.totalorder %s139, %s142
      %p148 = scmp.eq.s32.totalorder %s17, 0
      %p149 = por %p147, %p148
      %p150 = scmp.ne.s32.totalorder %s139, %s142
      %p151 = scmp.eq.s32.totalorder %s22, 3
      %p152 = por %p150, %p151
      %p153 = scmp.ne.s32.totalorder %s142, %s143
      %p154 = scmp.eq.s32.totalorder %s22, 0
      %p155 = por %p153, %p154
      %p156 = scmp.ne.s32.totalorder %s142, %s143
      %p157 = scmp.eq.s32.totalorder %s23, 3
      %p158 = por %p156, %p157
      %p160 = scmp.ne.s32.totalorder %s143, %s159
      %p161 = scmp.eq.s32.totalorder %s23, 0
      %p162 = por %p160, %p161
      %p163 = scmp.le.s32.totalorder 1, %s17
      %p164 = scmp.lt.s32.totalorder %s17, 5
      %p165 = pnand %p163, %p164
      %p166 = pneg %p165
      // Predicated region
      $region9: #{tpu_custom_call.1} parent=5 // pred_check
        _
      $region10: #{tpu_custom_call.1} parent=5 // pred_check_branch
        %168 = sbr.rel (%p165) target = $region12
      $region11: #{tpu_custom_call.1} parent=5 // pred_region
        %s169 = ssub.s32 %s17, 1
        // Predicated region
        $region13: #{tpu_custom_call.1} parent=11 // pred_check
          %p170 = pneg %p78
        $region14: #{tpu_custom_call.1} parent=11 // pred_check_branch
          %172 = sbr.rel (%p170) target = $region16
        $region15: #{tpu_custom_call.1} parent=11 // pred_region
          _
        $region16: #{tpu_custom_call.1} parent=11 // pred_fallthru
          _
        // Predicated region
        $region17: #{tpu_custom_call.1} parent=11 // pred_check
          %p173 = pneg %p99
        $region18: #{tpu_custom_call.1} parent=11 // pred_check_branch
          %175 = sbr.rel (%p173) target = $region20
        $region19: #{tpu_custom_call.1} parent=11 // pred_region
          _
        $region20: #{tpu_custom_call.1} parent=11 // pred_fallthru
          _
      $region12: #{tpu_custom_call.1} parent=5 // pred_fallthru
        _
      %p176 = scmp.lt.s32.totalorder %s17, 4
      // Predicated region
      $region21: #{tpu_custom_call.1} parent=5 // pred_check
        %p177 = pneg %p176
      $region22: #{tpu_custom_call.1} parent=5 // pred_check_branch
        %179 = sbr.rel (%p177) target = $region24
      $region23: #{tpu_custom_call.1} parent=5 // pred_region
        // Predicated region
        $region25: #{tpu_custom_call.1} parent=23 // pred_check
          %p180 = pneg %p51
        $region26: #{tpu_custom_call.1} parent=23 // pred_check_branch
          %182 = sbr.rel (%p180) target = $region28
        $region27: #{tpu_custom_call.1} parent=23 // pred_region
          %s183 = sand.u32 %s41, 1
          %s184 = sand.u32 %s41, 1
          %s185 = smul.addr %s184, 16
          %s186 = scalar_lea.vmem [#allocation2], %s185
          %s187 = smul.addr %s24, 4
          %s188 = sadd.s32 %s25, %s187
          %s189 = smul.addr %s188, 8
          %s190 = scalar_lea.vmem %s0, %s189
          // Predicated region
          $region29: #{tpu_custom_call.1} parent=27 // pred_check
            _
          $region30: #{tpu_custom_call.1} parent=27 // pred_check_branch
            %192 = sbr.rel (0) target = $region32
          $region31: #{tpu_custom_call.1} parent=27 // pred_region
            // Predicated region
            $region33: #{tpu_custom_call.1} parent=31 // pred_check
              _
            $region34: #{tpu_custom_call.1} parent=31 // pred_check_branch
              %194 = sbr.rel (0) target = $region36
            $region35: #{tpu_custom_call.1} parent=31 // pred_region
              // Predicated region
              $region48: #{tpu_custom_call.1} parent=35 // pred_check
                _
              $region49: #{tpu_custom_call.1} parent=35 // pred_check_branch
                %211 = sbr.rel (0) target = $region51
              $region50: #{tpu_custom_call.1} parent=35 // pred_region
                loop: start=0, step=1, limit=1
                $region52: #{tpu_custom_call.1} parent=50 // loop_pre_header
                  _
                $region53: #{tpu_custom_call.1} parent=50 // loop_header
                  %s213 = sphi 0, %s217
                  %p214 = scmp.ge.s32.totalorder %s213, 1
                  %s218 = sphi %s190, %s190
                  %s219 = sphi %s186, %s186
                $region54: #{tpu_custom_call.1} parent=50 // loop_header_branch
                  %216 = sbr.rel (%p214) target = $region58
                $region55: #{tpu_custom_call.1} parent=50 // loop_body
                  %v220 = vld [vmem:[%s218] sm:$0xff]
                  %221 = vst [vmem:[%s219] sm:$0xff] %v220
                  %v222 = vld [vmem:[%s218 + $0x10] sm:$0xff]
                  %223 = vst [vmem:[%s219 + $0x8] sm:$0xff] %v222
                $region56: #{tpu_custom_call.1} parent=50 // loop_footer
                  %s217 = sadd.s32 1, %s213
                $region57: #{tpu_custom_call.1} parent=50 // loop_footer_branch
                  %212 = sbr.rel target = $region53
                $region58: #{tpu_custom_call.1} parent=50 // loop_exit
                  _
              $region51: #{tpu_custom_call.1} parent=35 // pred_fallthru
                _
              // Predicated region
              $region59: #{tpu_custom_call.1} parent=35 // pred_check
                _
              $region60: #{tpu_custom_call.1} parent=35 // pred_check_branch
                %225 = sbr.rel target = $region62
              $region61: #{tpu_custom_call.1} parent=35 // pred_region
                _
              $region62: #{tpu_custom_call.1} parent=35 // pred_fallthru
                _
            $region36: #{tpu_custom_call.1} parent=31 // pred_fallthru
              _
            // Predicated region
            $region37: #{tpu_custom_call.1} parent=31 // pred_check
              _
            $region38: #{tpu_custom_call.1} parent=31 // pred_check_branch
              %196 = sbr.rel target = $region40
            $region39: #{tpu_custom_call.1} parent=31 // pred_region
              loop: start=0, step=1, limit=1
              $region41: #{tpu_custom_call.1} parent=39 // loop_pre_header
                _
              $region42: #{tpu_custom_call.1} parent=39 // loop_header
                %s199 = sphi 0, %s203
                %p200 = scmp.ge.s32.totalorder %s199, 1
                %s204 = sphi %s190, %s190
                %s205 = sphi %s186, %s186
              $region43: #{tpu_custom_call.1} parent=39 // loop_header_branch
                %202 = sbr.rel (%p200) target = $region47
              $region44: #{tpu_custom_call.1} parent=39 // loop_body
                %v206 = vld [vmem:[%s204] sm:$0xff]
                %207 = vst [vmem:[%s205] sm:$0xff] %v206
                %v208 = vld [vmem:[%s204 + $0x10] sm:$0xff]
                %209 = vst [vmem:[%s205 + $0x8] sm:$0xff] %v208
              $region45: #{tpu_custom_call.1} parent=39 // loop_footer
                %s203 = sadd.s32 1, %s199
              $region46: #{tpu_custom_call.1} parent=39 // loop_footer_branch
                %198 = sbr.rel target = $region42
              $region47: #{tpu_custom_call.1} parent=39 // loop_exit
                _
            $region40: #{tpu_custom_call.1} parent=31 // pred_fallthru
              _
          $region32: #{tpu_custom_call.1} parent=27 // pred_fallthru
            _
          %226 = vnop
        $region28: #{tpu_custom_call.1} parent=23 // pred_fallthru
          _
      $region24: #{tpu_custom_call.1} parent=5 // pred_fallthru
        _
      %p227 = scmp.le.s32.totalorder 1, %s17
      %p228 = scmp.lt.s32.totalorder %s17, 5
      %p229 = pnand %p227, %p228
      %p230 = pneg %p229
      // Predicated region
      $region63: #{tpu_custom_call.1} parent=5 // pred_check
        _
      $region64: #{tpu_custom_call.1} parent=5 // pred_check_branch
        %232 = sbr.rel (%p229) target = $region66
      $region65: #{tpu_custom_call.1} parent=5 // pred_region
        %s233 = ssub.s32 %s17, 1
        %s234 = sand.u32 %s44, 1
        %s235 = sand.u32 %s44, 1
        %s236 = smul.addr %s235, 16
        %s237 = scalar_lea.vmem [#allocation2], %s236
        // Predicated region
        $region67: #{tpu_custom_call.1} parent=65 // pred_check
          %p238 = pneg %p57
        $region68: #{tpu_custom_call.1} parent=65 // pred_check_branch
          %240 = sbr.rel (%p238) target = $region70
        $region69: #{tpu_custom_call.1} parent=65 // pred_region
          _
        $region70: #{tpu_custom_call.1} parent=65 // pred_fallthru
          _
        %s241 = sand.u32 %s44, 1
        %s242 = sand.u32 %s44, 1
        %s243 = smul.addr %s242, 16
        %s244 = scalar_lea.vmem [#allocation2], %s243
        %p245 = pneg %p57
        %p246 = pneg %p54
        %p247 = pneg %p78
        %p248 = pneg %p75
        %p249 = pneg %p99
        %p250 = pneg %p96
        %p251 = pneg %p127
        %p252 = pneg %p124
        %s253 = sand.u32 %s114, 1
        %s254 = scalar_lea.sflag [#allocation4], %s253
        %s255 = sand.u32 %s114, 1
        %s256 = smul.addr %s255, 128
        %s257 = scalar_lea.vmem [#allocation3], %s256
        %p258 = pneg %p155
        %p259 = pneg %p152
        %s260 = sand.u32 %s142, 1
        %s261 = scalar_lea.sflag [#allocation6], %s260
        %s262 = sand.u32 %s142, 1
        %s263 = smul.addr %s262, 16
        %s264 = scalar_lea.vmem [#allocation5], %s263
        %s265 = smul.u32 16, %s27
        %v266 = vld [vmem:[%s237] sm:$0xff]
        %v267 = vld [vmem:[%s237 + $0x8] sm:$0xff]
        %v268 = vld [vmem:[%s1] sm:$0xff]
        %v269 = vld [vmem:[%s1 + $0x8] sm:$0xff]
        %v270 = vld [vmem:[%s1 + $0x10] sm:$0xff]
        %v271 = vld [vmem:[%s1 + $0x18] sm:$0xff]
        %v272 = vld [vmem:[%s1 + $0x20] sm:$0xff]
        %v273 = vld [vmem:[%s1 + $0x28] sm:$0xff]
        %v274 = vld [vmem:[%s1 + $0x30] sm:$0xff]
        %v275 = vld [vmem:[%s1 + $0x38] sm:$0xff]
        %v276 = vld [vmem:[%s1 + $0x40] sm:$0xff]
        %v277 = vld [vmem:[%s1 + $0x48] sm:$0xff]
        %v278 = vld [vmem:[%s1 + $0x50] sm:$0xff]
        %v279 = vld [vmem:[%s1 + $0x58] sm:$0xff]
        %v280 = vld [vmem:[%s1 + $0x60] sm:$0xff]
        %v281 = vld [vmem:[%s1 + $0x68] sm:$0xff]
        %v282 = vld [vmem:[%s1 + $0x70] sm:$0xff]
        %v283 = vld [vmem:[%s1 + $0x78] sm:$0xff]
        %v284 = vld [vmem:[%s1 + $0x80] sm:$0xff]
        %v285 = vld [vmem:[%s1 + $0x88] sm:$0xff]
        %v286 = vld [vmem:[%s2] sm:$0xff]
        %v287 = vld [vmem:[%s2 + $0x8] sm:$0xff]
        %v288 = vld [vmem:[%s2 + $0x10] sm:$0xff]
        %v289 = vld [vmem:[%s2 + $0x18] sm:$0xff]
        %v290 = vld [vmem:[%s2 + $0x20] sm:$0xff]
        %v291 = vld [vmem:[%s2 + $0x28] sm:$0xff]
        %v292 = vld [vmem:[%s2 + $0x30] sm:$0xff]
        %v293 = vld [vmem:[%s2 + $0x38] sm:$0xff]
        %v294 = vld [vmem:[%s2 + $0x40] sm:$0xff]
        %v295 = vld [vmem:[%s2 + $0x48] sm:$0xff]
        %v296 = vld [vmem:[%s2 + $0x50] sm:$0xff]
        %v297 = vld [vmem:[%s2 + $0x58] sm:$0xff]
        %v298 = vld [vmem:[%s2 + $0x60] sm:$0xff]
        %v299 = vld [vmem:[%s2 + $0x68] sm:$0xff]
        %v300 = vld [vmem:[%s2 + $0x70] sm:$0xff]
        %v301 = vld [vmem:[%s2 + $0x78] sm:$0xff]
        %v302 = vld [vmem:[%s2 + $0x80] sm:$0xff]
        %v303 = vld [vmem:[%s2 + $0x88] sm:$0xff]
        %305 = vset.pattern.permute.xlu0 0
        %306 = vperm.xlu0 %305, %v286
        %v307 = vpop.permute.xlu0 %306
        %310 = vset.pattern.permute.xlu0 0
        %311 = vperm.xlu0 %310, %v287
        %v312 = vpop.permute.xlu0 %311
        %315 = vset.pattern.permute.xlu0 0
        %316 = vperm.xlu0 %315, %v288
        %v317 = vpop.permute.xlu0 %316
        %320 = vset.pattern.permute.xlu0 0
        %321 = vperm.xlu0 %320, %v289
        %v322 = vpop.permute.xlu0 %321
        %325 = vset.pattern.permute.xlu0 0
        %326 = vperm.xlu0 %325, %v290
        %v327 = vpop.permute.xlu0 %326
        %330 = vset.pattern.permute.xlu0 0
        %331 = vperm.xlu0 %330, %v291
        %v332 = vpop.permute.xlu0 %331
        %335 = vset.pattern.permute.xlu0 0
        %336 = vperm.xlu0 %335, %v292
        %v337 = vpop.permute.xlu0 %336
        %340 = vset.pattern.permute.xlu0 0
        %341 = vperm.xlu0 %340, %v293
        %v342 = vpop.permute.xlu0 %341
        %345 = vset.pattern.permute.xlu0 0
        %346 = vperm.xlu0 %345, %v294
        %v347 = vpop.permute.xlu0 %346
        %350 = vset.pattern.permute.xlu0 0
        %351 = vperm.xlu0 %350, %v295
        %v352 = vpop.permute.xlu0 %351
        %355 = vset.pattern.permute.xlu0 0
        %356 = vperm.xlu0 %355, %v296
        %v357 = vpop.permute.xlu0 %356
        %360 = vset.pattern.permute.xlu0 0
        %361 = vperm.xlu0 %360, %v297
        %v362 = vpop.permute.xlu0 %361
        %365 = vset.pattern.permute.xlu0 0
        %366 = vperm.xlu0 %365, %v298
        %v367 = vpop.permute.xlu0 %366
        %370 = vset.pattern.permute.xlu0 0
        %371 = vperm.xlu0 %370, %v299
        %v372 = vpop.permute.xlu0 %371
        %375 = vset.pattern.permute.xlu0 0
        %376 = vperm.xlu0 %375, %v300
        %v377 = vpop.permute.xlu0 %376
        %380 = vset.pattern.permute.xlu0 0
        %381 = vperm.xlu0 %380, %v301
        %v382 = vpop.permute.xlu0 %381
        %385 = vset.pattern.permute.xlu0 0
        %386 = vperm.xlu0 %385, %v302
        %v387 = vpop.permute.xlu0 %386
        %390 = vset.pattern.permute.xlu0 0
        %391 = vperm.xlu0 %390, %v303
        %v392 = vpop.permute.xlu0 %391
        %vm394 = vcmask 130048
        %v396 = vsel %vm394, %v268, 0
        %v399 = vsel %vm394, %v269, 0
        %v402 = vsel %vm394, %v270, 0
        %v405 = vsel %vm394, %v271, 0
        %v408 = vsel %vm394, %v272, 0
        %v411 = vsel %vm394, %v273, 0
        %v414 = vsel %vm394, %v274, 0
        %v417 = vsel %vm394, %v275, 0
        %v420 = vsel %vm394, %v276, 0
        %v423 = vsel %vm394, %v277, 0
        %v426 = vsel %vm394, %v278, 0
        %v429 = vsel %vm394, %v279, 0
        %v432 = vsel %vm394, %v280, 0
        %v435 = vsel %vm394, %v281, 0
        %v438 = vsel %vm394, %v282, 0
        %v441 = vsel %vm394, %v283, 0
        %v444 = vsel %vm394, %v284, 0
        %v447 = vsel %vm394, %v285, 0
        %449 = vmatprep.subr.mxu0 0.0
        %450 = vmatpush1.msra.mxu0 %v266
        %451 = vmatprep.subr.mxu0 0.0
        %452 = vmatpush1.msra.mxu0 %v267
        %453 = vmatprep.subr.mxu0 0.0
        %454 = vmatpush1.msra.mxu0 0.0
        %455 = vmatprep.subr.mxu0 0.0
        %456 = vmatpush1.msra.mxu0 0.0
        %457 = vmatprep.subr.mxu0 0.0
        %458 = vmatpush1.msra.mxu0 0.0
        %459 = vmatprep.subr.mxu0 0.0
        %460 = vmatpush1.msra.mxu0 0.0
        %461 = vmatprep.subr.mxu0 0.0
        %462 = vmatpush1.msra.mxu0 0.0
        %463 = vmatprep.subr.mxu0 0.0
        %464 = vmatpush1.msra.mxu0 0.0
        %465 = vmatprep.subr.mxu0 0.0
        %466 = vmatpush1.msra.mxu0 0.0
        %467 = vmatprep.subr.mxu0 0.0
        %468 = vmatpush1.msra.mxu0 0.0
        %469 = vmatprep.subr.mxu0 0.0
        %470 = vmatpush1.msra.mxu0 0.0
        %471 = vmatprep.subr.mxu0 0.0
        %472 = vmatpush1.msra.mxu0 0.0
        %473 = vmatprep.subr.mxu0 0.0
        %474 = vmatpush1.msra.mxu0 0.0
        %475 = vmatprep.subr.mxu0 0.0
        %476 = vmatpush1.msra.mxu0 0.0
        %477 = vmatprep.subr.mxu0 0.0
        %478 = vmatpush1.msra.mxu0 0.0
        %479 = vmatprep.subr.mxu0 0.0
        %480 = vmatpush1.msra.mxu0 0.0
        %481 = vmatprep.subr.mxu0 0.0
        %482 = vmatpush1.msra.mxu0 0.0
        %483 = vmatprep.subr.mxu0 0.0
        %484 = vmatpush1.msra.mxu0 0.0
        %485 = vmatprep.subr.mxu0 0.0
        %486 = vmatpush1.msra.mxu0 0.0
        %487 = vmatprep.subr.mxu0 0.0
        %488 = vmatpush1.msra.mxu0 0.0
        %489 = vmatprep.subr.mxu0 0.0
        %490 = vmatpush1.msra.mxu0 0.0
        %491 = vmatprep.subr.mxu0 0.0
        %492 = vmatpush1.msra.mxu0 0.0
        %493 = vmatprep.subr.mxu0 0.0
        %494 = vmatpush1.msra.mxu0 0.0
        %495 = vmatprep.subr.mxu0 0.0
        %496 = vmatpush1.msra.mxu0 0.0
        %497 = vmatprep.subr.mxu0 0.0
        %498 = vmatpush1.msra.mxu0 0.0
        %499 = vmatprep.subr.mxu0 0.0
        %500 = vmatpush1.msra.mxu0 0.0
        %501 = vmatprep.subr.mxu0 0.0
        %502 = vmatpush1.msra.mxu0 0.0
        %503 = vmatprep.subr.mxu0 0.0
        %504 = vmatpush1.msra.mxu0 0.0
        %505 = vmatprep.subr.mxu0 0.0
        %506 = vmatpush1.msra.mxu0 0.0
        %507 = vmatprep.subr.mxu0 0.0
        %508 = vmatpush1.msra.mxu0 0.0
        %509 = vmatprep.subr.mxu0 0.0
        %510 = vmatpush1.msra.mxu0 0.0
        %511 = vmatprep.subr.mxu0 0.0
        %512 = vmatpush1.msra.mxu0 0.0
        %513 = vmatprep.mubr.f32.mxu0 0.0
        %514 = vmatmul.mubr.f32.gmra.mrb[0].mxu0 %v396
        %v515 = vpop.f32.mrb[0].mxu0
        %v516 = vadd.f32 %v307, %v515
        %v517 = vpop.f32.mrb[0].mxu0
        %518 = vmatprep.mubr.f32.mxu0 0.0
        %519 = vmatmul.mubr.f32.gmra.mrb[0].mxu0 %v399
        %v520 = vpop.f32.mrb[0].mxu0
        %v521 = vadd.f32 %v312, %v520
        %v522 = vpop.f32.mrb[0].mxu0
        %523 = vmatprep.mubr.f32.mxu0 0.0
        %524 = vmatmul.mubr.f32.gmra.mrb[0].mxu0 %v402
        %v525 = vpop.f32.mrb[0].mxu0
        %v526 = vadd.f32 %v317, %v525
        %v527 = vpop.f32.mrb[0].mxu0
        %528 = vmatprep.mubr.f32.mxu0 0.0
        %529 = vmatmul.mubr.f32.gmra.mrb[0].mxu0 %v405
        %v530 = vpop.f32.mrb[0].mxu0
        %v531 = vadd.f32 %v322, %v530
        %v532 = vpop.f32.mrb[0].mxu0
        %533 = vmatprep.mubr.f32.mxu0 0.0
        %534 = vmatmul.mubr.f32.gmra.mrb[0].mxu0 %v408
        %v535 = vpop.f32.mrb[0].mxu0
        %v536 = vadd.f32 %v327, %v535
        %v537 = vpop.f32.mrb[0].mxu0
        %538 = vmatprep.mubr.f32.mxu0 0.0
        %539 = vmatmul.mubr.f32.gmra.mrb[0].mxu0 %v411
        %v540 = vpop.f32.mrb[0].mxu0
        %v541 = vadd.f32 %v332, %v540
        %v542 = vpop.f32.mrb[0].mxu0
        %543 = vmatprep.mubr.f32.mxu0 0.0
        %544 = vmatmul.mubr.f32.gmra.mrb[0].mxu0 %v414
        %v545 = vpop.f32.mrb[0].mxu0
        %v546 = vadd.f32 %v337, %v545
        %v547 = vpop.f32.mrb[0].mxu0
        %548 = vmatprep.mubr.f32.mxu0 0.0
        %549 = vmatmul.mubr.f32.gmra.mrb[0].mxu0 %v417
        %v550 = vpop.f32.mrb[0].mxu0
        %v551 = vadd.f32 %v342, %v550
        %v552 = vpop.f32.mrb[0].mxu0
        %553 = vmatprep.mubr.f32.mxu0 0.0
        %554 = vmatmul.mubr.f32.gmra.mrb[0].mxu0 %v420
        %v555 = vpop.f32.mrb[0].mxu0
        %v556 = vadd.f32 %v347, %v555
        %v557 = vpop.f32.mrb[0].mxu0
        %558 = vmatprep.mubr.f32.mxu0 0.0
        %559 = vmatmul.mubr.f32.gmra.mrb[0].mxu0 %v423
        %v560 = vpop.f32.mrb[0].mxu0
        %v561 = vadd.f32 %v352, %v560
        %v562 = vpop.f32.mrb[0].mxu0
        %563 = vmatprep.mubr.f32.mxu0 0.0
        %564 = vmatmul.mubr.f32.gmra.mrb[0].mxu0 %v426
        %v565 = vpop.f32.mrb[0].mxu0
        %v566 = vadd.f32 %v357, %v565
        %v567 = vpop.f32.mrb[0].mxu0
        %568 = vmatprep.mubr.f32.mxu0 0.0
        %569 = vmatmul.mubr.f32.gmra.mrb[0].mxu0 %v429
        %v570 = vpop.f32.mrb[0].mxu0
        %v571 = vadd.f32 %v362, %v570
        %v572 = vpop.f32.mrb[0].mxu0
        %573 = vmatprep.mubr.f32.mxu0 0.0
        %574 = vmatmul.mubr.f32.gmra.mrb[0].mxu0 %v432
        %v575 = vpop.f32.mrb[0].mxu0
        %v576 = vadd.f32 %v367, %v575
        %v577 = vpop.f32.mrb[0].mxu0
        %578 = vmatprep.mubr.f32.mxu0 0.0
        %579 = vmatmul.mubr.f32.gmra.mrb[0].mxu0 %v435
        %v580 = vpop.f32.mrb[0].mxu0
        %v581 = vadd.f32 %v372, %v580
        %v582 = vpop.f32.mrb[0].mxu0
        %583 = vmatprep.mubr.f32.mxu0 0.0
        %584 = vmatmul.mubr.f32.gmra.mrb[0].mxu0 %v438
        %v585 = vpop.f32.mrb[0].mxu0
        %v586 = vadd.f32 %v377, %v585
        %v587 = vpop.f32.mrb[0].mxu0
        %588 = vmatprep.mubr.f32.mxu0 0.0
        %589 = vmatmul.mubr.f32.gmra.mrb[0].mxu0 %v441
        %v590 = vpop.f32.mrb[0].mxu0
        %v591 = vadd.f32 %v382, %v590
        %v592 = vpop.f32.mrb[0].mxu0
        %593 = vmatprep.mubr.f32.mxu0 0.0
        %594 = vmatmul.mubr.f32.gmra.mrb[0].mxu0 %v444
        %v595 = vpop.f32.mrb[0].mxu0
        %v596 = vadd.f32 %v387, %v595
        %v597 = vpop.f32.mrb[0].mxu0
        %598 = vmatprep.mubr.f32.mxu0 0.0
        %599 = vmatmul.mubr.f32.gmra.mrb[0].mxu0 %v447
        %v600 = vpop.f32.mrb[0].mxu0
        %v601 = vadd.f32 %v392, %v600
        %v602 = vpop.f32.mrb[0].mxu0
        %603 = vdwg.mxu0
        %604 = vxpose.xlu0.b32.start [1/16] %v516, 128
        %605 = vxpose.xlu0.b32.cont [2/16] %v521, 128
        %606 = vxpose.xlu0.b32.cont [3/16] %v526, 128
        %607 = vxpose.xlu0.b32.cont [4/16] %v531, 128
        %608 = vxpose.xlu0.b32.cont [5/16] %v536, 128
        %609 = vxpose.xlu0.b32.cont [6/16] %v541, 128
        %610 = vxpose.xlu0.b32.cont [7/16] %v546, 128
        %611 = vxpose.xlu0.b32.cont [8/16] %v551, 128
        %612 = vxpose.xlu0.b32.cont [9/16] %v556, 128
        %613 = vxpose.xlu0.b32.cont [10/16] %v561, 128
        %614 = vxpose.xlu0.b32.cont [11/16] %v566, 128
        %615 = vxpose.xlu0.b32.cont [12/16] %v571, 128
        %616 = vxpose.xlu0.b32.cont [13/16] %v576, 128
        %617 = vxpose.xlu0.b32.cont [14/16] %v581, 128
        %618 = vxpose.xlu0.b32.cont [15/16] %v586, 128
        %619 = vxpose.xlu0.b32.end [16/16] %v591, 128
        %v620 = vpop.trf.xlu0
        %v621 = vpop.trf.xlu0
        %v622 = vpop.trf.xlu0
        %v623 = vpop.trf.xlu0
        %v624 = vpop.trf.xlu0
        %v625 = vpop.trf.xlu0
        %v626 = vpop.trf.xlu0
        %v627 = vpop.trf.xlu0
        %v628 = vpop.trf.xlu0
        %v629 = vpop.trf.xlu0
        %v630 = vpop.trf.xlu0
        %v631 = vpop.trf.xlu0
        %v632 = vpop.trf.xlu0
        %v633 = vpop.trf.xlu0
        %v634 = vpop.trf.xlu0
        %v635 = vpop.trf.xlu0
        %636 = vst [vmem:[%s257] sm:$0xff] %v620
        %637 = vst [vmem:[%s257 + $0x8] sm:$0xff] %v621
        %638 = vst [vmem:[%s257 + $0x10] sm:$0xff] %v622
        %639 = vst [vmem:[%s257 + $0x18] sm:$0xff] %v623
        %640 = vst [vmem:[%s257 + $0x20] sm:$0xff] %v624
        %641 = vst [vmem:[%s257 + $0x28] sm:$0xff] %v625
        %642 = vst [vmem:[%s257 + $0x30] sm:$0xff] %v626
        %643 = vst [vmem:[%s257 + $0x38] sm:$0xff] %v627
        %644 = vst [vmem:[%s257 + $0x40] sm:$0xff] %v628
        %645 = vst [vmem:[%s257 + $0x48] sm:$0xff] %v629
        %646 = vst [vmem:[%s257 + $0x50] sm:$0xff] %v630
        %647 = vst [vmem:[%s257 + $0x58] sm:$0xff] %v631
        %648 = vst [vmem:[%s257 + $0x60] sm:$0xff] %v632
        %649 = vst [vmem:[%s257 + $0x68] sm:$0xff] %v633
        %650 = vst [vmem:[%s257 + $0x70] sm:$0xff] %v634
        %651 = vst [vmem:[%s257 + $0x78] sm:$0xff] %v635
        %652 = vst [vmem:[%s264] sm:$0xff] %v596
        %653 = vst [vmem:[%s264 + $0x8] sm:$0xff] %v601
        %s654 = sand.u32 %s114, 1
        %s655 = scalar_lea.sflag [#allocation4], %s654
        %s656 = sand.u32 %s114, 1
        %s657 = smul.addr %s656, 128
        %s658 = scalar_lea.vmem [#allocation3], %s657
        %s659 = sand.u32 %s142, 1
        %s660 = scalar_lea.sflag [#allocation6], %s659
        %s661 = sand.u32 %s142, 1
        %s662 = smul.addr %s661, 16
        %s663 = scalar_lea.vmem [#allocation5], %s662
        // Predicated region
        $region71: #{tpu_custom_call.1} parent=65 // pred_check
          %p664 = pneg %p124
        $region72: #{tpu_custom_call.1} parent=65 // pred_check_branch
          %666 = sbr.rel (%p664) target = $region74
        $region73: #{tpu_custom_call.1} parent=65 // pred_region
          %s667 = smul.u32 16, %s27
          %s669 = ssub.s32 2048, 2048
          %670 = vsyncadd %s655, %s669
          %s671 = smul.addr %s26, 32
          %s672 = sadd.s32 %s667, %s671
          %s673 = smul.addr %s672, 128
          %s674 = scalar_lea.hbm %s3, %s673
          %s675 = sshll.u32 %s658, 4
          %s676 = int_to_ptr.vmem [resolvable:$true] %s675
          %681 = dma.vmem_to_hbm [thread:$0]  %s676, 2048, %s674, %s655, 128, 128, 8
        $region74: #{tpu_custom_call.1} parent=65 // pred_fallthru
          _
        // Predicated region
        $region75: #{tpu_custom_call.1} parent=65 // pred_check
          %p682 = pneg %p152
        $region76: #{tpu_custom_call.1} parent=65 // pred_check_branch
          %684 = sbr.rel (%p682) target = $region78
        $region77: #{tpu_custom_call.1} parent=65 // pred_region
          %s686 = ssub.s32 256, 256
          %687 = vsyncadd %s660, %s686
          %s688 = smul.addr %s26, 4
          %s689 = sadd.s32 %s27, %s688
          %s690 = smul.addr %s689, 128
          %s691 = scalar_lea.hbm %s4, %s690
          %s692 = sshll.u32 %s663, 4
          %s693 = int_to_ptr.vmem [resolvable:$true] %s692
          %698 = dma.vmem_to_hbm [thread:$0]  %s693, 256, %s691, %s660, 128, 256, 8
        $region78: #{tpu_custom_call.1} parent=65 // pred_fallthru
          _
      $region66: #{tpu_custom_call.1} parent=5 // pred_fallthru
        _
      %p699 = scmp.le.s32.totalorder 2, %s17
      // Predicated region
      $region79: #{tpu_custom_call.1} parent=5 // pred_check
        %p700 = pneg %p699
      $region80: #{tpu_custom_call.1} parent=5 // pred_check_branch
        %702 = sbr.rel (%p700) target = $region82
      $region81: #{tpu_custom_call.1} parent=5 // pred_region
        %s703 = ssub.s32 %s17, 2
        // Predicated region
        $region83: #{tpu_custom_call.1} parent=81 // pred_check
          %p704 = pneg %p130
        $region84: #{tpu_custom_call.1} parent=81 // pred_check_branch
          %706 = sbr.rel (%p704) target = $region86
        $region85: #{tpu_custom_call.1} parent=81 // pred_region
          %s707 = sand.u32 %s115, 1
          %s708 = scalar_lea.sflag [#allocation4], %s707
          %s709 = sand.u32 %s115, 1
          %s710 = smul.addr %s709, 128
          %s711 = scalar_lea.vmem [#allocation3], %s710
          %712 = dma.done %s708, 2048
        $region86: #{tpu_custom_call.1} parent=81 // pred_fallthru
          _
        // Predicated region
        $region87: #{tpu_custom_call.1} parent=81 // pred_check
          %p713 = pneg %p158
        $region88: #{tpu_custom_call.1} parent=81 // pred_check_branch
          %715 = sbr.rel (%p713) target = $region90
        $region89: #{tpu_custom_call.1} parent=81 // pred_region
          %s716 = sand.u32 %s143, 1
          %s717 = scalar_lea.sflag [#allocation6], %s716
          %s718 = sand.u32 %s143, 1
          %s719 = smul.addr %s718, 16
          %s720 = scalar_lea.vmem [#allocation5], %s719
          %721 = dma.done %s717, 256
        $region90: #{tpu_custom_call.1} parent=81 // pred_fallthru
          _
      $region82: #{tpu_custom_call.1} parent=5 // pred_fallthru
        _
    $region6: #{tpu_custom_call.1} parent=1 // loop_footer
      %s21 = sadd.s32 1, %s17
    $region7: #{tpu_custom_call.1} parent=1 // loop_footer_branch
      %16 = sbr.rel target = $region3
    $region8: #{tpu_custom_call.1} parent=1 // loop_exit
      _
    %722 = vsyncpa [#allocation4], 1
    %s723 = scalar_lea.sflag [#allocation4], 1
    %724 = vsyncpa %s723, 1
    %725 = vsyncpa [#allocation6], 1
    %s726 = scalar_lea.sflag [#allocation6], 1
    %727 = vsyncpa %s726, 1

</llo_original>
